<compile_context>
chip_gen: v6e
topology: v6e:2x2x1
jax: 0.10.0
libtpu: 0.0.40
codegen_flags: <defaults>
</compile_context>

<pallas_src>
import math
import functools

import numpy as np
import jax
import jax.numpy as jnp
from jax.experimental import pallas as pl
from jax.experimental.pallas import tpu as pltpu


# ----------------------------------------------------------------------------
# Positional encoding table (reproduces the PyTorch double loop exactly, including
# the 2*i / 2*(i+1) exponent quirk).  Like the PyTorch module, requires even d_embed.
# ----------------------------------------------------------------------------
def build_pe_table(d_embed, max_seq_len):
    pe = np.zeros((max_seq_len, d_embed), dtype=np.float32)
    for pos in range(max_seq_len):
        for i in range(0, d_embed, 2):
            pe[pos, i] = math.sin(pos / 10000 ** (2 * i / d_embed))
            pe[pos, i + 1] = math.cos(pos / 10000 ** (2 * (i + 1) / d_embed))
    return pe  # host-side numpy table, built once at module init


# ----------------------------------------------------------------------------
# Pallas kernel: one sequence-tile per grid step; pure VPU elementwise work.
# ----------------------------------------------------------------------------
def pos_encoding_kernel(x_ref, pe_ref, o_ref, *, scale):
    # x_ref: (TL, N, E), pe_ref: (TL, 1, E) -> broadcast over the batch (sublane) dim.
    o_ref[...] = (x_ref[...] * scale + pe_ref[...]).astype(o_ref.dtype)


# ----------------------------------------------------------------------------
# Wrapper: no transposes, no relayout — x stays seq-first (L, N, E).
# ----------------------------------------------------------------------------
def positional_encoding(x, pe_table, *, seq_tile=None):
    """x: (L, N, E) float32, seq-first as in the PyTorch module."""
    L, N, E = x.shape
    scale = math.sqrt(E)

    # (L, 1, E) slice of the table; broadcast over batch happens inside the kernel.
    pe = jnp.asarray(np.asarray(pe_table, dtype=np.float32)[:L]).reshape(L, 1, E)

    tl = L if seq_tile is None else min(seq_tile, L)
    grid = (pl.cdiv(L, tl),)

    kernel = functools.partial(pos_encoding_kernel, scale=scale)
    out = pl.pallas_call(
        kernel,
        out_shape=jax.ShapeDtypeStruct((L, N, E), x.dtype),
        grid_spec=pltpu.PrefetchScalarGridSpec(
            num_scalar_prefetch=0,
            grid=grid,
            in_specs=[
                pl.BlockSpec((tl, N, E), lambda i: (i, 0, 0)),   # x tile
                pl.BlockSpec((tl, 1, E), lambda i: (i, 0, 0)),   # matching PE rows
            ],
            out_specs=pl.BlockSpec((tl, N, E), lambda i: (i, 0, 0)),
        ),
        compiler_params=pltpu.CompilerParams(
            dimension_semantics=("parallel",),
        ),
    )(x, pe)
    return out


# ----------------------------------------------------------------------------
# Pure-JAX reference (mirrors PositionalEncoding.forward).
# ----------------------------------------------------------------------------
def reference_forward(x, pe_table):
    L, N, E = x.shape
    pe = jnp.asarray(np.asarray(pe_table, dtype=np.float32)[:L])
    return x * math.sqrt(E) + pe[:, None, :]


if __name__ == "__main__":
    # Small shapes consistent with the module: seq=8, batch=2, d_embed=32.
    d_embed, max_seq_len = 32, 100
    L, N = 8, 2

    key = jax.random.PRNGKey(0)
    x = jax.random.normal(key, (L, N, d_embed), jnp.float32)

    pe_table = build_pe_table(d_embed, max_seq_len)

    out = positional_encoding(x, pe_table)
    out = jax.block_until_ready(out)

    ref = reference_forward(x, pe_table)
    assert out.shape == (L, N, d_embed)
    np.testing.assert_allclose(np.asarray(out), np.asarray(ref), rtol=1e-6, atol=1e-6)

    print("KERNEL_OK")
</pallas_src>

<mosaic_0001>
module attributes {stable_mosaic.version = 11 : i64} {
  func.func @pos_encoding_kernel(%arg0: i32, %arg1: memref<8x2x32xf32, #tpu.memory_space<vmem>>, %arg2: memref<8x1x32xf32, #tpu.memory_space<vmem>>, %arg3: memref<8x2x32xf32, #tpu.memory_space<vmem>>) attributes {dimension_semantics = [#tpu.dimension_semantics<parallel>], iteration_bounds = array<i64: 1>, scalar_prefetch = 0 : i64, scratch_operands = 0 : i64, tpu.core_type = #tpu.core_type<tc>, window_params = [{transform_indices = @transform_0, window_bounds = array<i64: 8, 2, 32>}, {transform_indices = @transform_1, window_bounds = array<i64: 8, 1, 32>}, {transform_indices = @transform_2, window_bounds = array<i64: 8, 2, 32>}]} {
    %c0 = arith.constant 0 : index
    %c0_0 = arith.constant 0 : index
    %c0_1 = arith.constant 0 : index
    %0 = vector.load %arg1[%c0, %c0_0, %c0_1] : memref<8x2x32xf32, #tpu.memory_space<vmem>>, vector<8x2x32xf32>
    %cst = arith.constant 5.65685415 : f32
    %1 = vector.broadcast %cst : f32 to vector<8x2x32xf32>
    %2 = arith.mulf %0, %1 : vector<8x2x32xf32>
    %c0_2 = arith.constant 0 : index
    %c0_3 = arith.constant 0 : index
    %c0_4 = arith.constant 0 : index
    %3 = vector.load %arg2[%c0_2, %c0_3, %c0_4] : memref<8x1x32xf32, #tpu.memory_space<vmem>>, vector<8x1x32xf32>
    %4 = vector.broadcast %3 : vector<8x1x32xf32> to vector<8x2x32xf32>
    %5 = arith.addf %2, %4 : vector<8x2x32xf32>
    %c0_5 = arith.constant 0 : index
    %c0_6 = arith.constant 0 : index
    %c0_7 = arith.constant 0 : index
    %6 = vector.load %arg3[%c0_5, %c0_6, %c0_7] : memref<8x2x32xf32, #tpu.memory_space<vmem>>, vector<8x2x32xf32>
    tpu.vector_store %arg3[%c0_5, %c0_6, %c0_7], %5 {strides = array<i32>} : memref<8x2x32xf32, #tpu.memory_space<vmem>>, vector<8x2x32xf32>,
    return
  }
  func.func @transform_0(%arg0: i32) -> (i32, i32, i32) {
    %c0_i32 = arith.constant 0 : i32
    %c0_i32_0 = arith.constant 0 : i32
    %c0_i32_1 = arith.constant 0 : i32
    return %arg0, %c0_i32, %c0_i32_0 : i32, i32, i32
  }
  func.func @transform_1(%arg0: i32) -> (i32, i32, i32) {
    %c0_i32 = arith.constant 0 : i32
    %c0_i32_0 = arith.constant 0 : i32
    %c0_i32_1 = arith.constant 0 : i32
    return %arg0, %c0_i32, %c0_i32_0 : i32, i32, i32
  }
  func.func @transform_2(%arg0: i32) -> (i32, i32, i32) {
    %c0_i32 = arith.constant 0 : i32
    %c0_i32_0 = arith.constant 0 : i32
    %c0_i32_1 = arith.constant 0 : i32
    return %arg0, %c0_i32, %c0_i32_0 : i32, i32, i32
  }
}

</mosaic_0001>

<llo_original>
// kernel: tpu_custom_call.1
$region0: #{tpu_custom_call.1}
  #allocation0 [shape = 'u32[]', space=smem, size = 0x4, offset = 0x4, fixed_abs, tag = 'smem constant byte address 0x4 - core index']
  #allocation1 [shape = 'u32[144,128]{1,0:T(1,128)}', space=vmem, size = 0x12000, scoped, tag = 'internal scratch']
  %s0 = inlined_call_operand.hbm [shape: f32[8,2,32], index: 0, kind: input, shape index: {}]
  %s1 = inlined_call_operand.hbm [shape: f32[8,1,32], index: 1, kind: input, shape index: {}]
  %s2 = inlined_call_operand.hbm [shape: f32[8,2,32], index: 2, kind: output, shape index: {}]
  %s3 = sld [smem:[#allocation0]]
  $region26: #{tpu_custom_call.1} parent=0
    _
  %s5 = ssub.s32 1, %s3
  %s6 = scalar_select 0, %s5, %s3
  $region1: #{tpu_custom_call.1} parent=0
    #allocation2 [shape = 'u8[8192]{0}', space=vmem, size = 0x2000, scoped, tag = 'input window, operand 0, single buffered']
    #allocation3 [shape = 's32[1]{0}', space=sflag, size = 0x4, scoped, tag = 'scoped memory for tpu_custom_call.1']
    #allocation4 [shape = 's32[1]{0}', space=sflag, size = 0x4, scoped, tag = 'scoped memory for tpu_custom_call.1']
    #allocation5 [shape = 'u8[4096]{0}', space=vmem, size = 0x1000, scoped, tag = 'input window, operand 1, single buffered']
    #allocation6 [shape = 's32[1]{0}', space=sflag, size = 0x4, scoped, tag = 'scoped memory for tpu_custom_call.1']
    #allocation7 [shape = 'u8[8192]{0}', space=vmem, size = 0x2000, scoped, tag = 'output window, operand 0, single buffered']
    %7 = vsyncpa [#allocation3], 0
    %8 = vsyncpa [#allocation6], 0
    %9 = vsyncpa [#allocation4], 0
    // Predicated region
    $region2: #{tpu_custom_call.1} parent=1 // pred_check
      _
    $region3: #{tpu_custom_call.1} parent=1 // pred_check_branch
      %11 = sbr.rel (0) target = $region5
    $region4: #{tpu_custom_call.1} parent=1 // pred_region
      %s13 = ssub.s32 256, 256
      %14 = vsyncadd [#allocation3], %s13
      %s15 = sshll.u32 [#allocation2], 4
      %s16 = int_to_ptr.vmem [resolvable:$true] %s15
      %21 = dma.hbm_to_vmem [thread:$0]  %s0, 256, %s16, [#allocation3], 32, 32, 2
    $region5: #{tpu_custom_call.1} parent=1 // pred_fallthru
      _
    // Predicated region
    $region6: #{tpu_custom_call.1} parent=1 // pred_check
      _
    $region7: #{tpu_custom_call.1} parent=1 // pred_check_branch
      %23 = sbr.rel (0) target = $region9
    $region8: #{tpu_custom_call.1} parent=1 // pred_region
      %s25 = ssub.s32 128, 128
      %26 = vsyncadd [#allocation6], %s25
      %s27 = sshll.u32 [#allocation5], 4
      %s28 = int_to_ptr.vmem [resolvable:$true] %s27
      %33 = dma.hbm_to_vmem [thread:$0]  %s1, 128, %s28, [#allocation6], 16, 16, 1
    $region9: #{tpu_custom_call.1} parent=1 // pred_fallthru
      _
    // Predicated region
    $region10: #{tpu_custom_call.1} parent=1 // pred_check
      _
    $region11: #{tpu_custom_call.1} parent=1 // pred_check_branch
      %35 = sbr.rel (0) target = $region13
    $region12: #{tpu_custom_call.1} parent=1 // pred_region
      %36 = dma.done [#allocation3], 256
    $region13: #{tpu_custom_call.1} parent=1 // pred_fallthru
      _
    // Predicated region
    $region14: #{tpu_custom_call.1} parent=1 // pred_check
      _
    $region15: #{tpu_custom_call.1} parent=1 // pred_check_branch
      %38 = sbr.rel (0) target = $region17
    $region16: #{tpu_custom_call.1} parent=1 // pred_region
      %39 = dma.done [#allocation6], 128
    $region17: #{tpu_custom_call.1} parent=1 // pred_fallthru
      _
    %v40 = vld [vmem:[#allocation2] sm:$0x3]
    %v41 = vld [vmem:[#allocation2 + $0x2] sm:$0x3]
    %v42 = vld [vmem:[#allocation2 + $0x4] sm:$0x3]
    %v43 = vld [vmem:[#allocation2 + $0x6] sm:$0x3]
    %v44 = vld [vmem:[#allocation2 + $0x8] sm:$0x3]
    %v45 = vld [vmem:[#allocation2 + $0xa] sm:$0x3]
    %v46 = vld [vmem:[#allocation2 + $0xc] sm:$0x3]
    %v47 = vld [vmem:[#allocation2 + $0xe] sm:$0x3]
    %v48 = vmul.f32 %v40, 5.656854
    %v49 = vmul.f32 %v41, 5.656854
    %v50 = vmul.f32 %v42, 5.656854
    %v51 = vmul.f32 %v43, 5.656854
    %v52 = vmul.f32 %v44, 5.656854
    %v53 = vmul.f32 %v45, 5.656854
    %v54 = vmul.f32 %v46, 5.656854
    %v55 = vmul.f32 %v47, 5.656854
    %v56 = vld [vmem:[#allocation5] sm:$0x1]
    %v57 = vld [vmem:[#allocation5 + $0x1] sm:$0x1]
    %v58 = vld [vmem:[#allocation5 + $0x2] sm:$0x1]
    %v59 = vld [vmem:[#allocation5 + $0x3] sm:$0x1]
    %v60 = vld [vmem:[#allocation5 + $0x4] sm:$0x1]
    %v61 = vld [vmem:[#allocation5 + $0x5] sm:$0x1]
    %v62 = vld [vmem:[#allocation5 + $0x6] sm:$0x1]
    %v63 = vld [vmem:[#allocation5 + $0x7] sm:$0x1]
    %v72 = vlaneseq
    %v73 = vshrl.u32 %v72, 7
    %v74 = vsub.s32 0, %v73
    %v75 = vrot.slane %v56, %v74
    %v76 = vlaneseq
    %v77 = vshrl.u32 %v76, 7
    %v78 = vsub.s32 0, %v77
    %v79 = vrot.slane %v57, %v78
    %v80 = vlaneseq
    %v81 = vshrl.u32 %v80, 7
    %v82 = vsub.s32 0, %v81
    %v83 = vrot.slane %v58, %v82
    %v84 = vlaneseq
    %v85 = vshrl.u32 %v84, 7
    %v86 = vsub.s32 0, %v85
    %v87 = vrot.slane %v59, %v86
    %v88 = vlaneseq
    %v89 = vshrl.u32 %v88, 7
    %v90 = vsub.s32 0, %v89
    %v91 = vrot.slane %v60, %v90
    %v92 = vlaneseq
    %v93 = vshrl.u32 %v92, 7
    %v94 = vsub.s32 0, %v93
    %v95 = vrot.slane %v61, %v94
    %v96 = vlaneseq
    %v97 = vshrl.u32 %v96, 7
    %v98 = vsub.s32 0, %v97
    %v99 = vrot.slane %v62, %v98
    %v100 = vlaneseq
    %v101 = vshrl.u32 %v100, 7
    %v102 = vsub.s32 0, %v101
    %v103 = vrot.slane %v63, %v102
    %v112 = vadd.f32 %v48, %v75
    %v113 = vadd.f32 %v49, %v79
    %v114 = vadd.f32 %v50, %v83
    %v115 = vadd.f32 %v51, %v87
    %v116 = vadd.f32 %v52, %v91
    %v117 = vadd.f32 %v53, %v95
    %v118 = vadd.f32 %v54, %v99
    %v119 = vadd.f32 %v55, %v103
    %vm120 = vcmask 254976
    %121 = vst.msk [vmem:[#allocation7] sm:$0x3] %vm120, %v112
    %122 = vst.msk [vmem:[#allocation7 + $0x2] sm:$0x3] %vm120, %v113
    %123 = vst.msk [vmem:[#allocation7 + $0x4] sm:$0x3] %vm120, %v114
    %124 = vst.msk [vmem:[#allocation7 + $0x6] sm:$0x3] %vm120, %v115
    %125 = vst.msk [vmem:[#allocation7 + $0x8] sm:$0x3] %vm120, %v116
    %126 = vst.msk [vmem:[#allocation7 + $0xa] sm:$0x3] %vm120, %v117
    %127 = vst.msk [vmem:[#allocation7 + $0xc] sm:$0x3] %vm120, %v118
    %128 = vst.msk [vmem:[#allocation7 + $0xe] sm:$0x3] %vm120, %v119
    // Predicated region
    $region18: #{tpu_custom_call.1} parent=1 // pred_check
      _
    $region19: #{tpu_custom_call.1} parent=1 // pred_check_branch
      %130 = sbr.rel (0) target = $region21
    $region20: #{tpu_custom_call.1} parent=1 // pred_region
      %s132 = ssub.s32 256, 256
      %133 = vsyncadd [#allocation4], %s132
      %s134 = sshll.u32 [#allocation7], 4
      %s135 = int_to_ptr.vmem [resolvable:$true] %s134
      %140 = dma.vmem_to_hbm [thread:$0]  %s135, 256, %s2, [#allocation4], 32, 32, 2
    $region21: #{tpu_custom_call.1} parent=1 // pred_fallthru
      _
    // Predicated region
    $region22: #{tpu_custom_call.1} parent=1 // pred_check
      _
    $region23: #{tpu_custom_call.1} parent=1 // pred_check_branch
      %142 = sbr.rel (0) target = $region25
    $region24: #{tpu_custom_call.1} parent=1 // pred_region
      %143 = dma.done [#allocation4], 256
    $region25: #{tpu_custom_call.1} parent=1 // pred_fallthru
      _
    %144 = vsyncpa [#allocation3], 1
    %145 = vsyncpa [#allocation6], 1
    %146 = vsyncpa [#allocation4], 1

</llo_original>
